<compile_context>
chip_gen: v7x
topology: tpu7x:2x2x1
jax: 0.10.0
libtpu: 0.0.40
codegen_flags: <defaults>
</compile_context>

<pallas_src>
import functools

import jax
import jax.numpy as jnp
from jax.experimental import pallas as pl
from jax.experimental.pallas import tpu as pltpu


def _aggregation_kernel(tri_ref, x_ref, mem_ref, out_ref, carry_ref,
                        *, seq_len, mask_tail):
    """One (batch-block, feature-block, time-chunk) grid step.

    tri_ref:   (Ts, Ts)      lower-triangular 0/1 mask (resident across grid)
    x_ref:     (Bb, Tc, Fc)  inputs for this time chunk
    mem_ref:   (Bb, 1, Fc)   initial state s_k for this (batch, feature) block
    out_ref:   (Bb, Tc, Fc)  states s for this chunk
    carry_ref: (Bb, 1, Fc)   f32 running sum carried across time chunks

    NOTE: the carry is only correct because the time axis is the innermost
    "arbitrary" grid axis and is re-seeded at t == 0 for every (b, f) block.
    Do not reorder the grid or mark the time axis "parallel".
    """
    t_idx = pl.program_id(2)

    # Fold the memory seed into the f32 carry at the first time chunk.
    @pl.when(t_idx == 0)
    def _():
        carry_ref[...] = mem_ref[...].astype(jnp.float32)

    bb, tc, fc = x_ref.shape
    ts = tri_ref.shape[0]
    n_sub = tc // ts
    tri = tri_ref[...]                                     # (Ts, Ts)

    for b in range(bb):                                    # static unroll, bb <= 4
        carry = carry_ref[b]                               # (1, Fc) f32
        for s in range(n_sub):
            xs = x_ref[b, pl.ds(s * ts, ts), :]            # (Ts, Fc)
            if mask_tail:
                # Zero rows beyond the true sequence length so garbage in the
                # partial last T block can never contaminate valid rows (the
                # matmul contracts over rows) or the carry.
                rows = jax.lax.broadcasted_iota(jnp.int32, (ts, 1), 0)
                rows = rows + (t_idx * tc + s * ts)
                xs = jnp.where(rows < seq_len, xs, jnp.zeros_like(xs))
            # Inclusive sub-chunk prefix sum on the MXU, accumulated in f32.
            csum = jnp.dot(tri, xs, preferred_element_type=jnp.float32)
            out_ref[b, pl.ds(s * ts, ts), :] = (carry + csum).astype(out_ref.dtype)
            # Sum-based carry update (XLU reduce) instead of reading the last
            # matmul row: breaks the dependency on the full MXU result.
            carry = carry + jnp.sum(xs, axis=0, keepdims=True, dtype=jnp.float32)
        carry_ref[b] = carry


def _round_up(n: int, m: int) -> int:
    return (n + m - 1) // m * m


def aggregation_forward(x: jax.Array, memory: jax.Array) -> jax.Array:
    """x: [B, T, F], memory: [B, 1, F] -> [B, T, F]  (s_t = s_k + cumsum_t x)."""
    B, T, F = x.shape
    assert memory.shape == (B, 1, F), memory.shape
    itemsize = int(jnp.dtype(x.dtype).itemsize)

    # ---- Tile selection ----------------------------------------------------
    # Lane (feature) tile: multiple of 128 (or the full dim when F <= 128) so
    # stores stay unmasked; cap lifted to 1024 lanes for big-block DMA.
    if F <= 128:
        Fc = F
    else:
        Fc = min(1024, _round_up(F, 128))
    # Time tile: multiple of 8, capped at 256.  Ragged tails handled in-kernel.
    Tc = min(256, _round_up(T, 8))
    # MXU contraction sub-chunk: bf16 keeps the full Tc contraction; f32 drops
    # to Ts = 64 so the f32 matmul stays off the memory-bound critical path.
    if x.dtype == jnp.bfloat16:
        Ts = Tc
    else:
        Ts = 64 if (Tc % 64 == 0 and Tc > 64) else Tc
    assert Tc % Ts == 0
    # Batch packing: target ~4 MiB blocks (flat part of the HBM roofline
    # curve, amortizes the ~0.35 us per-grid-step overhead); unroll capped at 4.
    target_block_bytes = 4 << 20
    Bb = max(1, min(B, 4, target_block_bytes // max(1, Tc * Fc * itemsize)))
    # v7x has 2 TensorCores: make sure the two "parallel" grid axes provide at
    # least 2 independent blocks so neither core idles.
    while pl.cdiv(B, Bb) * pl.cdiv(F, Fc) < 2:
        if Fc >= 256:
            Fc //= 2            # stays a multiple of 128
        elif Bb > 1:
            Bb -= 1
        else:
            break

    grid = (pl.cdiv(B, Bb), pl.cdiv(F, Fc), pl.cdiv(T, Tc))
    mask_tail = (T % Tc) != 0

    # Lower-triangular 0/1 mask for one Ts sub-chunk, built once on the host
    # and kept resident in VMEM via a constant index_map (0/1 are exact in
    # bf16, keeping the MXU in native bf16 mode for bf16 inputs).
    tri_dtype = jnp.bfloat16 if x.dtype == jnp.bfloat16 else jnp.float32
    tri = (jnp.arange(Ts)[None, :] <= jnp.arange(Ts)[:, None]).astype(tri_dtype)

    # ---- VMEM budget (sized against v7x's 64 MiB physical VMEM) ------------
    blk = Bb * Tc * Fc * itemsize
    vmem_est = (4 * blk                                          # x + out, double-buffered
                + 2 * Bb * Fc * itemsize                         # memory seed
                + 2 * Ts * Ts * int(jnp.dtype(tri_dtype).itemsize)  # tri
                + Bb * Fc * 4                                    # f32 carry scratch
                + 4 * Ts * Fc * 4)                               # f32 matmul/sum temps
    vmem_limit = int(min(48 * 1024 * 1024, max(2 * vmem_est, 16 * 1024 * 1024)))

    # Advisory cost estimate (consistent, unpadded dims).
    cost = pl.CostEstimate(
        flops=2 * B * T * F * Ts,
        transcendentals=0,
        bytes_accessed=itemsize * (2 * B * T * F + 2 * B * F),
    )

    kernel = functools.partial(_aggregation_kernel, seq_len=T, mask_tail=mask_tail)

    return pl.pallas_call(
        kernel,
        out_shape=jax.ShapeDtypeStruct((B, T, F), x.dtype),
        grid_spec=pltpu.PrefetchScalarGridSpec(
            num_scalar_prefetch=0,
            grid=grid,
            in_specs=[
                pl.BlockSpec((Ts, Ts), lambda b, f, t: (0, 0)),          # tri (resident)
                pl.BlockSpec((Bb, Tc, Fc), lambda b, f, t: (b, t, f)),   # x chunk
                pl.BlockSpec((Bb, 1, Fc), lambda b, f, t: (b, 0, f)),    # memory seed
            ],
            out_specs=pl.BlockSpec((Bb, Tc, Fc), lambda b, f, t: (b, t, f)),
            scratch_shapes=[pltpu.VMEM((Bb, 1, Fc), jnp.float32)],       # running carry
        ),
        compiler_params=pltpu.CompilerParams(
            # Time MUST stay the innermost "arbitrary" axis (see kernel note).
            dimension_semantics=("parallel", "parallel", "arbitrary"),
            vmem_limit_bytes=vmem_limit,
        ),
        cost_estimate=cost,
    )(tri, x, memory)


if __name__ == "__main__":
    key = jax.random.PRNGKey(0)
    kx, km = jax.random.split(key)

    # Small shape matching the module contract (batch, seq, hidden).
    B, T, F = 2, 8, 32
    x = jax.random.normal(kx, (B, T, F), dtype=jnp.float32)
    memory = jax.random.normal(km, (B, 1, F), dtype=jnp.float32)

    out = jax.block_until_ready(aggregation_forward(x, memory))
    ref = memory + jnp.cumsum(x, axis=1)
    assert out.shape == (B, T, F)
    assert jnp.allclose(out, ref, atol=1e-4, rtol=1e-4), "mismatch vs reference (small)"

    # Ragged shape: exercises partial T/F blocks (no wrapper padding), the
    # in-kernel tail mask, the chunked-time carry and the >=2-parallel-block rule.
    B2, T2, F2 = 3, 300, 200
    x2 = jax.random.normal(kx, (B2, T2, F2), dtype=jnp.float32)
    mem2 = jax.random.normal(km, (B2, 1, F2), dtype=jnp.float32)
    out2 = jax.block_until_ready(aggregation_forward(x2, mem2))
    ref2 = mem2 + jnp.cumsum(x2, axis=1)
    assert out2.shape == (B2, T2, F2)
    assert jnp.allclose(out2, ref2, atol=1e-3, rtol=1e-3), "mismatch vs reference (ragged)"

    print("KERNEL_OK")
</pallas_src>

<mosaic_0001>
module attributes {stable_mosaic.version = 11 : i64} {
  func.func @_aggregation_kernel(%arg0: i32, %arg1: i32, %arg2: i32, %arg3: memref<8x8xf32, #tpu.memory_space<vmem>>, %arg4: memref<1x8x32xf32, #tpu.memory_space<vmem>>, %arg5: memref<1x1x32xf32, #tpu.memory_space<vmem>>, %arg6: memref<1x8x32xf32, #tpu.memory_space<vmem>>, %arg7: memref<1x1x32xf32, #tpu.memory_space<vmem>>) attributes {dimension_semantics = [#tpu.dimension_semantics<parallel>, #tpu.dimension_semantics<parallel>, #tpu.dimension_semantics<arbitrary>], iteration_bounds = array<i64: 2, 1, 1>, scalar_prefetch = 0 : i64, scratch_operands = 1 : i64, tpu.core_type = #tpu.core_type<tc>, window_params = [{pipeline_mode = #tpu.pipeline_mode<synchronous>, transform_indices = @transform_0, window_bounds = array<i64: 8, 8>}, {transform_indices = @transform_1, window_bounds = array<i64: 1, 8, 32>}, {transform_indices = @transform_2, window_bounds = array<i64: 1, 1, 32>}, {transform_indices = @transform_3, window_bounds = array<i64: 1, 8, 32>}]} {
    %c0_i32 = arith.constant 0 : i32
    %0 = arith.cmpi eq, %arg2, %c0_i32 : i32
    %1 = arith.extui %0 : i1 to i32
    %c0_i32_0 = arith.constant 0 : i32
    %2 = arith.cmpi ne, %1, %c0_i32_0 : i32
    scf.if %2 {
      %c0_15 = arith.constant 0 : index
      %c0_16 = arith.constant 0 : index
      %c0_17 = arith.constant 0 : index
      %20 = vector.load %arg5[%c0_15, %c0_16, %c0_17] : memref<1x1x32xf32, #tpu.memory_space<vmem>>, vector<1x1x32xf32>
      %c0_18 = arith.constant 0 : index
      %c0_19 = arith.constant 0 : index
      %c0_20 = arith.constant 0 : index
      %21 = vector.load %arg7[%c0_18, %c0_19, %c0_20] : memref<1x1x32xf32, #tpu.memory_space<vmem>>, vector<1x1x32xf32>
      tpu.vector_store %arg7[%c0_18, %c0_19, %c0_20], %20 {strides = array<i32>} : memref<1x1x32xf32, #tpu.memory_space<vmem>>, vector<1x1x32xf32>,
    } else {
    }
    %c0 = arith.constant 0 : index
    %c0_1 = arith.constant 0 : index
    %3 = vector.load %arg3[%c0, %c0_1] : memref<8x8xf32, #tpu.memory_space<vmem>>, vector<8x8xf32>
    %c0_2 = arith.constant 0 : index
    %c0_3 = arith.constant 0 : index
    %c0_4 = arith.constant 0 : index
    %4 = vector.load %arg7[%c0_2, %c0_3, %c0_4] : memref<1x1x32xf32, #tpu.memory_space<vmem>>, vector<1x1x32xf32>
    %5 = vector.shape_cast %4 : vector<1x1x32xf32> to vector<1x32xf32>
    %c0_5 = arith.constant 0 : index
    %c0_6 = arith.constant 0 : index
    %c0_7 = arith.constant 0 : index
    %6 = vector.load %arg4[%c0_5, %c0_6, %c0_7] : memref<1x8x32xf32, #tpu.memory_space<vmem>>, vector<1x8x32xf32>
    %7 = vector.shape_cast %6 : vector<1x8x32xf32> to vector<8x32xf32>
    %cst = arith.constant dense<0.000000e+00> : vector<8x32xf32>
    %8 = tpu.matmul %3, %7, %cst {dimension_numbers = #tpu.dot_dimension_numbers<[1], [0], [0], [1], [0, 0, 1, 1], [], []>} : vector<8x8xf32>, vector<8x32xf32>, vector<8x32xf32> -> vector<8x32xf32>
    %9 = vector.broadcast %5 : vector<1x32xf32> to vector<8x32xf32>
    %10 = arith.addf %9, %8 : vector<8x32xf32>
    %c0_8 = arith.constant 0 : index
    %c0_9 = arith.constant 0 : index
    %c0_10 = arith.constant 0 : index
    %11 = vector.load %arg6[%c0_8, %c0_9, %c0_10] : memref<1x8x32xf32, #tpu.memory_space<vmem>>, vector<1x8x32xf32>
    %12 = vector.shape_cast %11 : vector<1x8x32xf32> to vector<8x32xf32>
    %13 = vector.shape_cast %10 : vector<8x32xf32> to vector<1x8x32xf32>
    tpu.vector_store %arg6[%c0_8, %c0_9, %c0_10], %13 {strides = array<i32>} : memref<1x8x32xf32, #tpu.memory_space<vmem>>, vector<1x8x32xf32>,
    %cst_11 = arith.constant dense<0.000000e+00> : vector<32xf32>
    %14 = vector.multi_reduction <add>, %7, %cst_11 [0] : vector<8x32xf32> to vector<32xf32>
    %15 = vector.shape_cast %14 : vector<32xf32> to vector<1x32xf32>
    %16 = arith.addf %5, %15 : vector<1x32xf32>
    %c0_12 = arith.constant 0 : index
    %c0_13 = arith.constant 0 : index
    %c0_14 = arith.constant 0 : index
    %17 = vector.load %arg7[%c0_12, %c0_13, %c0_14] : memref<1x1x32xf32, #tpu.memory_space<vmem>>, vector<1x1x32xf32>
    %18 = vector.shape_cast %17 : vector<1x1x32xf32> to vector<1x32xf32>
    %19 = vector.shape_cast %16 : vector<1x32xf32> to vector<1x1x32xf32>
    tpu.vector_store %arg7[%c0_12, %c0_13, %c0_14], %19 {strides = array<i32>} : memref<1x1x32xf32, #tpu.memory_space<vmem>>, vector<1x1x32xf32>,
    return
  }
  func.func @transform_0(%arg0: i32, %arg1: i32, %arg2: i32) -> (i32, i32) {
    %c0_i32 = arith.constant 0 : i32
    %c0_i32_0 = arith.constant 0 : i32
    %c0_i32_1 = arith.constant 0 : i32
    return %c0_i32, %c0_i32_0 : i32, i32
  }
  func.func @transform_1(%arg0: i32, %arg1: i32, %arg2: i32) -> (i32, i32, i32) {
    %c0_i32 = arith.constant 0 : i32
    return %arg0, %arg2, %arg1 : i32, i32, i32
  }
  func.func @transform_2(%arg0: i32, %arg1: i32, %arg2: i32) -> (i32, i32, i32) {
    %c0_i32 = arith.constant 0 : i32
    %c0_i32_0 = arith.constant 0 : i32
    return %arg0, %c0_i32, %arg1 : i32, i32, i32
  }
  func.func @transform_3(%arg0: i32, %arg1: i32, %arg2: i32) -> (i32, i32, i32) {
    %c0_i32 = arith.constant 0 : i32
    return %arg0, %arg2, %arg1 : i32, i32, i32
  }
}

</mosaic_0001>

<llo_original>
// kernel: tpu_custom_call.1
$region0: #{tpu_custom_call.1}
  #allocation0 [shape = 'u32[]', space=smem, size = 0x4, offset = 0x4, fixed_abs, tag = 'smem constant byte address 0x4 - core index']
  #allocation1 [shape = 'u32[144,128]{1,0:T(1,128)}', space=vmem, size = 0x12000, scoped, tag = 'internal scratch']
  #allocation2 [shape = 'f32[1,1,32]{2,1,0:T(1,128)}', space=vmem, size = 0x200, scoped, tag = 'scratch operand']
  %s0 = inlined_call_operand.hbm [shape: f32[8,8], index: 0, kind: input, shape index: {}]
  %s1 = inlined_call_operand.hbm [shape: f32[2,8,32], index: 1, kind: input, shape index: {}]
  %s2 = inlined_call_operand.vmem [shape: f32[2,1,32], index: 2, kind: input, shape index: {}]
  %s3 = inlined_call_operand.hbm [shape: f32[2,8,32], index: 3, kind: output, shape index: {}]
  %s4 = sld [smem:[#allocation0]]
  $region57: #{tpu_custom_call.1} parent=0
    _
  %s6 = ssub.s32 1, %s4
  %s7 = scalar_select 0, %s6, %s4
  $region1: #{tpu_custom_call.1} parent=0
    #allocation3 [shape = 'u8[4096]{0}', space=vmem, size = 0x1000, scoped, tag = 'input window, operand 0, single buffered']
    #allocation4 [shape = 's32[2]{0}', space=sflag, size = 0x8, scoped, tag = 'scoped memory for tpu_custom_call.1']
    #allocation5 [shape = 's32[2]{0}', space=sflag, size = 0x8, scoped, tag = 'scoped memory for tpu_custom_call.1']
    #allocation6 [shape = 'u8[8192]{0}', space=vmem, size = 0x2000, scoped, tag = 'input window, operand 1']
    #allocation7 [shape = 's32[2]{0}', space=sflag, size = 0x8, scoped, tag = 'scoped memory for tpu_custom_call.1']
    #allocation8 [shape = 'u8[8192]{0}', space=vmem, size = 0x2000, scoped, tag = 'output window, operand 0']
    %8 = vsyncpa [#allocation4], 0
    %9 = vsyncpa [#allocation7], 0
    %s10 = scalar_lea.sflag [#allocation7], 1
    %11 = vsyncpa %s10, 0
    %12 = vsyncpa [#allocation5], 0
    %s13 = scalar_lea.sflag [#allocation5], 1
    %14 = vsyncpa %s13, 0
    loop: start=0, step=1, limit=4
    $region2: #{tpu_custom_call.1} parent=1 // loop_pre_header
      _
    $region3: #{tpu_custom_call.1} parent=1 // loop_header
      %s16 = sphi 0, %s20
      %p17 = scmp.ge.s32.totalorder %s16, 4
      %s23 = sphi 0, %s42
      %s24 = sphi 0, %s38
      %s25 = sphi 0, %s34
      %s26 = sphi 0, %s23
      %s27 = sphi 0, %s24
      %s28 = sphi 0, %s25
      %s29 = sphi 0, %s26
      %s30 = sphi 0, %s27
      %s31 = sphi 0, %s28
      %s43 = sphi 0, %s43
      %s45 = sphi 0, %s43
      %s46 = sphi 0, %s45
      %s60 = sphi 0, %s46
      %s70 = sphi 0, %s72
      %s73 = sphi 0, %s70
      %s74 = sphi 0, %s73
      %s90 = sphi 0, %s74
      %s98 = sphi 0, %s100
      %s101 = sphi 0, %s98
      %s102 = sphi 0, %s101
      %s118 = sphi 0, %s102
      %s128 = sphi 0, %s130
      %s131 = sphi 0, %s128
      %s132 = sphi 0, %s131
      %s148 = sphi 0, %s132
    $region4: #{tpu_custom_call.1} parent=1 // loop_header_branch
      %19 = sbr.rel (%p17) target = $region8
    $region5: #{tpu_custom_call.1} parent=1 // loop_body
      %s21 = ssub.s32 %s16, 1
      %s22 = ssub.s32 %s16, 2
      %s32 = sadd.s32 1, %s25
      %p33 = scmp.ge.s32.totalorder %s32, 1
      %s34 = scalar_select %p33, 0, %s32
      %s35 = sadd.s32 1, %s24
      %s36 = scalar_select %p33, %s35, %s24
      %p37 = scmp.ge.s32.totalorder %s36, 1
      %s38 = scalar_select %p37, 0, %s36
      %s39 = sadd.s32 1, %s23
      %s40 = scalar_select %p37, %s39, %s23
      %p41 = scmp.ge.s32.totalorder %s40, 2
      %s42 = scalar_select %p41, 0, %s40
      %s44 = sadd.s32 %s43, 1
      %p47 = scmp.eq.s32.totalorder %s16, 1
      %p48 = scmp.ne.s32.totalorder %s43, %s45
      %p49 = scmp.eq.s32.totalorder %s16, 0
      %p50 = por %p48, %p49
      %p51 = scmp.ne.s32.totalorder %s43, %s45
      %p52 = scmp.eq.s32.totalorder %s21, 1
      %p53 = por %p51, %p52
      %p54 = scmp.ne.s32.totalorder %s45, %s46
      %p55 = scmp.eq.s32.totalorder %s21, 0
      %p56 = por %p54, %p55
      %p57 = scmp.ne.s32.totalorder %s45, %s46
      %p58 = scmp.eq.s32.totalorder %s22, 1
      %p59 = por %p57, %p58
      %p61 = scmp.ne.s32.totalorder %s46, %s60
      %p62 = scmp.eq.s32.totalorder %s22, 0
      %p63 = por %p61, %p62
      %s64 = ssub.s32 %s23, %s42
      %s65 = ssub.s32 %s25, %s34
      %s66 = sor.u32 %s64, %s65
      %s67 = ssub.s32 %s24, %s38
      %s68 = sor.u32 %s66, %s67
      %p69 = scmp.eq.s32.totalorder %s68, 0
      %s71 = sadd.s32 %s70, 1
      %s72 = scalar_select %p69, %s70, %s71
      %p75 = pneg %p69
      %p76 = scmp.eq.s32.totalorder %s16, 1
      %p77 = por %p75, %p76
      %p78 = scmp.ne.s32.totalorder %s70, %s73
      %p79 = scmp.eq.s32.totalorder %s16, 0
      %p80 = por %p78, %p79
      %p81 = scmp.ne.s32.totalorder %s70, %s73
      %p82 = scmp.eq.s32.totalorder %s21, 1
      %p83 = por %p81, %p82
      %p84 = scmp.ne.s32.totalorder %s73, %s74
      %p85 = scmp.eq.s32.totalorder %s21, 0
      %p86 = por %p84, %p85
      %p87 = scmp.ne.s32.totalorder %s73, %s74
      %p88 = scmp.eq.s32.totalorder %s22, 1
      %p89 = por %p87, %p88
      %p91 = scmp.ne.s32.totalorder %s74, %s90
      %p92 = scmp.eq.s32.totalorder %s22, 0
      %p93 = por %p91, %p92
      %s94 = ssub.s32 %s23, %s42
      %s95 = ssub.s32 %s24, %s38
      %s96 = sor.u32 %s94, %s95
      %p97 = scmp.eq.s32.totalorder %s96, 0
      %s99 = sadd.s32 %s98, 1
      %s100 = scalar_select %p97, %s98, %s99
      %p103 = pneg %p97
      %p104 = scmp.eq.s32.totalorder %s16, 1
      %p105 = por %p103, %p104
      %p106 = scmp.ne.s32.totalorder %s98, %s101
      %p107 = scmp.eq.s32.totalorder %s16, 0
      %p108 = por %p106, %p107
      %p109 = scmp.ne.s32.totalorder %s98, %s101
      %p110 = scmp.eq.s32.totalorder %s21, 1
      %p111 = por %p109, %p110
      %p112 = scmp.ne.s32.totalorder %s101, %s102
      %p113 = scmp.eq.s32.totalorder %s21, 0
      %p114 = por %p112, %p113
      %p115 = scmp.ne.s32.totalorder %s101, %s102
      %p116 = scmp.eq.s32.totalorder %s22, 1
      %p117 = por %p115, %p116
      %p119 = scmp.ne.s32.totalorder %s102, %s118
      %p120 = scmp.eq.s32.totalorder %s22, 0
      %p121 = por %p119, %p120
      %s122 = ssub.s32 %s23, %s42
      %s123 = ssub.s32 %s25, %s34
      %s124 = sor.u32 %s122, %s123
      %s125 = ssub.s32 %s24, %s38
      %s126 = sor.u32 %s124, %s125
      %p127 = scmp.eq.s32.totalorder %s126, 0
      %s129 = sadd.s32 %s128, 1
      %s130 = scalar_select %p127, %s128, %s129
      %p133 = pneg %p127
      %p134 = scmp.eq.s32.totalorder %s16, 1
      %p135 = por %p133, %p134
      %p136 = scmp.ne.s32.totalorder %s128, %s131
      %p137 = scmp.eq.s32.totalorder %s16, 0
      %p138 = por %p136, %p137
      %p139 = scmp.ne.s32.totalorder %s128, %s131
      %p140 = scmp.eq.s32.totalorder %s21, 1
      %p141 = por %p139, %p140
      %p142 = scmp.ne.s32.totalorder %s131, %s132
      %p143 = scmp.eq.s32.totalorder %s21, 0
      %p144 = por %p142, %p143
      %p145 = scmp.ne.s32.totalorder %s131, %s132
      %p146 = scmp.eq.s32.totalorder %s22, 1
      %p147 = por %p145, %p146
      %p149 = scmp.ne.s32.totalorder %s132, %s148
      %p150 = scmp.eq.s32.totalorder %s22, 0
      %p151 = por %p149, %p150
      %p152 = scmp.le.s32.totalorder 1, %s16
      %p153 = scmp.lt.s32.totalorder %s16, 3
      %p154 = pnand %p152, %p153
      %p155 = pneg %p154
      // Predicated region
      $region9: #{tpu_custom_call.1} parent=5 // pred_check
        _
      $region10: #{tpu_custom_call.1} parent=5 // pred_check_branch
        %157 = sbr.rel (%p154) target = $region12
      $region11: #{tpu_custom_call.1} parent=5 // pred_region
        %s158 = ssub.s32 %s16, 1
        // Predicated region
        $region13: #{tpu_custom_call.1} parent=11 // pred_check
          %p159 = pneg %p56
        $region14: #{tpu_custom_call.1} parent=11 // pred_check_branch
          %161 = sbr.rel (%p159) target = $region16
        $region15: #{tpu_custom_call.1} parent=11 // pred_region
          %s163 = ssub.s32 128, 128
          %164 = vsyncadd [#allocation4], %s163
          %s166 = sshll.u32 [#allocation3], 4
          %s167 = int_to_ptr.vmem [resolvable:$true] %s166
          %169 = dma.hbm_to_vmem [thread:$0]  %s0, 128, %s167, [#allocation4]
        $region16: #{tpu_custom_call.1} parent=11 // pred_fallthru
          _
      $region12: #{tpu_custom_call.1} parent=5 // pred_fallthru
        _
      %p170 = scmp.lt.s32.totalorder %s16, 2
      // Predicated region
      $region17: #{tpu_custom_call.1} parent=5 // pred_check
        %p171 = pneg %p170
      $region18: #{tpu_custom_call.1} parent=5 // pred_check_branch
        %173 = sbr.rel (%p171) target = $region20
      $region19: #{tpu_custom_call.1} parent=5 // pred_region
        // Predicated region
        $region21: #{tpu_custom_call.1} parent=19 // pred_check
          %p174 = pneg %p80
        $region22: #{tpu_custom_call.1} parent=19 // pred_check_branch
          %176 = sbr.rel (%p174) target = $region24
        $region23: #{tpu_custom_call.1} parent=19 // pred_region
          %s177 = sand.u32 %s70, 1
          %s178 = scalar_lea.sflag [#allocation7], %s177
          %s179 = sand.u32 %s70, 1
          %s180 = smul.addr %s179, 8
          %s181 = scalar_lea.vmem [#allocation6], %s180
          %s183 = ssub.s32 128, 128
          %184 = vsyncadd %s178, %s183
          %s185 = sadd.s32 %s24, %s25
          %s186 = sadd.s32 %s185, %s23
          %s187 = smul.addr %s186, 128
          %s188 = scalar_lea.hbm %s1, %s187
          %s190 = sshll.u32 %s181, 4
          %s191 = int_to_ptr.vmem [resolvable:$true] %s190
          %193 = dma.hbm_to_vmem [thread:$0]  %s188, 128, %s191, %s178
        $region24: #{tpu_custom_call.1} parent=19 // pred_fallthru
          _
        // Predicated region
        $region25: #{tpu_custom_call.1} parent=19 // pred_check
          %p194 = pneg %p108
        $region26: #{tpu_custom_call.1} parent=19 // pred_check_branch
          %196 = sbr.rel (%p194) target = $region28
        $region27: #{tpu_custom_call.1} parent=19 // pred_region
          %p197 = scmp.lt.s32.totalorder %s23, 1
          %s198 = scalar_select %p197, %s23, 1
          %p199 = scmp.lt.s32.totalorder %s24, 0
          %s200 = scalar_select %p199, %s24, 0
          %s201 = sadd.s32 %s200, %s198
          %s202 = scalar_lea.vmem %s2, %s201
        $region28: #{tpu_custom_call.1} parent=19 // pred_fallthru
          _
      $region20: #{tpu_custom_call.1} parent=5 // pred_fallthru
        _
      %p203 = scmp.le.s32.totalorder 1, %s16
      %p204 = scmp.lt.s32.totalorder %s16, 3
      %p205 = pnand %p203, %p204
      %p206 = pneg %p205
      // Predicated region
      $region29: #{tpu_custom_call.1} parent=5 // pred_check
        _
      $region30: #{tpu_custom_call.1} parent=5 // pred_check_branch
        %208 = sbr.rel (%p205) target = $region32
      $region31: #{tpu_custom_call.1} parent=5 // pred_region
        %s209 = ssub.s32 %s16, 1
        // Predicated region
        $region33: #{tpu_custom_call.1} parent=31 // pred_check
          %p210 = pneg %p56
        $region34: #{tpu_custom_call.1} parent=31 // pred_check_branch
          %212 = sbr.rel (%p210) target = $region36
        $region35: #{tpu_custom_call.1} parent=31 // pred_region
          %213 = dma.done [#allocation4], 128
        $region36: #{tpu_custom_call.1} parent=31 // pred_fallthru
          _
        %s214 = sand.u32 %s73, 1
        %s215 = scalar_lea.sflag [#allocation7], %s214
        %s216 = sand.u32 %s73, 1
        %s217 = smul.addr %s216, 8
        %s218 = scalar_lea.vmem [#allocation6], %s217
        // Predicated region
        $region37: #{tpu_custom_call.1} parent=31 // pred_check
          %p219 = pneg %p86
        $region38: #{tpu_custom_call.1} parent=31 // pred_check_branch
          %221 = sbr.rel (%p219) target = $region40
        $region39: #{tpu_custom_call.1} parent=31 // pred_region
          %222 = dma.done %s215, 128
        $region40: #{tpu_custom_call.1} parent=31 // pred_fallthru
          _
        %p223 = pneg %p56
        %p224 = pneg %p53
        %s225 = sand.u32 %s73, 1
        %s226 = scalar_lea.sflag [#allocation7], %s225
        %s227 = sand.u32 %s73, 1
        %s228 = smul.addr %s227, 8
        %s229 = scalar_lea.vmem [#allocation6], %s228
        %p230 = pneg %p86
        %p231 = pneg %p83
        %p232 = scmp.lt.s32.totalorder %s26, 1
        %s233 = scalar_select %p232, %s26, 1
        %p234 = scmp.lt.s32.totalorder %s27, 0
        %s235 = scalar_select %p234, %s27, 0
        %s236 = sadd.s32 %s235, %s233
        %s237 = scalar_lea.vmem %s2, %s236
        %p238 = pneg %p114
        %p239 = pneg %p111
        %p240 = pneg %p144
        %p241 = pneg %p141
        %s242 = sand.u32 %s131, 1
        %s243 = scalar_lea.sflag [#allocation5], %s242
        %s244 = sand.u32 %s131, 1
        %s245 = smul.addr %s244, 8
        %s246 = scalar_lea.vmem [#allocation8], %s245
        %p247 = scmp.lt.s32.totalorder %s26, 1
        %s248 = scalar_select %p247, %s26, 1
        %p249 = scmp.lt.s32.totalorder %s27, 0
        %s250 = scalar_select %p249, %s27, 0
        %s251 = sadd.s32 %s250, %s248
        %s252 = scalar_lea.vmem %s2, %s251
        %p253 = scmp.eq.s32.totalorder %s28, 0
        // Predicated region
        $region41: #{tpu_custom_call.1} parent=31 // pred_check
          %p254 = pneg %p253
        $region42: #{tpu_custom_call.1} parent=31 // pred_check_branch
          %256 = sbr.rel (%p254) target = $region44
        $region43: #{tpu_custom_call.1} parent=31 // pred_region
          %v257 = vld [vmem:[%s252] sm:$0x1]
          %vm258 = vcmask 253952
          %259 = vst.msk [vmem:[#allocation2] sm:$0x1] %vm258, %v257
        $region44: #{tpu_custom_call.1} parent=31 // pred_fallthru
          _
        %v260 = vld [vmem:[#allocation3] sm:$0xff]
        %v261 = vld [vmem:[#allocation2] sm:$0x1]
        %v262 = vld [vmem:[%s218] sm:$0xff]
        %vm263 = vcmask 64512
        %v265 = vsel %vm263, %v260, 0
        %267 = vmatprep.subr.mxu0 0.0
        %268 = vmatpush1.msra.mxu0 %v262
        %269 = vmatprep.subr.mxu0 0.0
        %270 = vmatpush1.msra.mxu0 0.0
        %271 = vmatprep.subr.mxu0 0.0
        %272 = vmatpush1.msra.mxu0 0.0
        %273 = vmatprep.subr.mxu0 0.0
        %274 = vmatpush1.msra.mxu0 0.0
        %275 = vmatprep.subr.mxu0 0.0
        %276 = vmatpush1.msra.mxu0 0.0
        %277 = vmatprep.subr.mxu0 0.0
        %278 = vmatpush1.msra.mxu0 0.0
        %279 = vmatprep.subr.mxu0 0.0
        %280 = vmatpush1.msra.mxu0 0.0
        %281 = vmatprep.subr.mxu0 0.0
        %282 = vmatpush1.msra.mxu0 0.0
        %283 = vmatprep.subr.mxu0 0.0
        %284 = vmatpush1.msra.mxu0 0.0
        %285 = vmatprep.subr.mxu0 0.0
        %286 = vmatpush1.msra.mxu0 0.0
        %287 = vmatprep.subr.mxu0 0.0
        %288 = vmatpush1.msra.mxu0 0.0
        %289 = vmatprep.subr.mxu0 0.0
        %290 = vmatpush1.msra.mxu0 0.0
        %291 = vmatprep.subr.mxu0 0.0
        %292 = vmatpush1.msra.mxu0 0.0
        %293 = vmatprep.subr.mxu0 0.0
        %294 = vmatpush1.msra.mxu0 0.0
        %295 = vmatprep.subr.mxu0 0.0
        %296 = vmatpush1.msra.mxu0 0.0
        %297 = vmatprep.subr.mxu0 0.0
        %298 = vmatpush1.msra.mxu0 0.0
        %299 = vmatprep.subr.mxu0 0.0
        %300 = vmatpush1.msra.mxu0 0.0
        %301 = vmatprep.subr.mxu0 0.0
        %302 = vmatpush1.msra.mxu0 0.0
        %303 = vmatprep.subr.mxu0 0.0
        %304 = vmatpush1.msra.mxu0 0.0
        %305 = vmatprep.subr.mxu0 0.0
        %306 = vmatpush1.msra.mxu0 0.0
        %307 = vmatprep.subr.mxu0 0.0
        %308 = vmatpush1.msra.mxu0 0.0
        %309 = vmatprep.subr.mxu0 0.0
        %310 = vmatpush1.msra.mxu0 0.0
        %311 = vmatprep.subr.mxu0 0.0
        %312 = vmatpush1.msra.mxu0 0.0
        %313 = vmatprep.subr.mxu0 0.0
        %314 = vmatpush1.msra.mxu0 0.0
        %315 = vmatprep.subr.mxu0 0.0
        %316 = vmatpush1.msra.mxu0 0.0
        %317 = vmatprep.subr.mxu0 0.0
        %318 = vmatpush1.msra.mxu0 0.0
        %319 = vmatprep.subr.mxu0 0.0
        %320 = vmatpush1.msra.mxu0 0.0
        %321 = vmatprep.subr.mxu0 0.0
        %322 = vmatpush1.msra.mxu0 0.0
        %323 = vmatprep.subr.mxu0 0.0
        %324 = vmatpush1.msra.mxu0 0.0
        %325 = vmatprep.subr.mxu0 0.0
        %326 = vmatpush1.msra.mxu0 0.0
        %327 = vmatprep.subr.mxu0 0.0
        %328 = vmatpush1.msra.mxu0 0.0
        %329 = vmatprep.subr.mxu0 0.0
        %330 = vmatpush1.msra.mxu0 0.0
        %331 = vmatprep.mubr.f32.mxu0 0.0
        %332 = vmatmul.mubr.f32.gmra.mrb[0].mxu0 %v265
        %v333 = vpop.f32.mrb[0].mxu0
        %v334 = vadd.f32 0.0, %v333
        %v335 = vpop.f32.mrb[0].mxu0
        %336 = vdwg.mxu0
        %v338 = vlaneseq
        %v339 = vshrl.u32 %v338, 7
        %v340 = vsub.s32 0, %v339
        %v341 = vrot.slane %v261, %v340
        %v343 = vadd.f32 %v341, %v334
        %vm344 = vcmask 261120
        %345 = vst.msk [vmem:[%s246] sm:$0xff] %vm344, %v343
        %v346 = vsel %vm344, %v262, 0.0
        %v347 = vrot.slane %v346, 4
        %v348 = vadd.f32 %v346, %v347
        %v349 = vrot.slane %v348, 2
        %v350 = vadd.f32 %v348, %v349
        %v351 = vrot.slane %v350, 1
        %v352 = vadd.f32 %v350, %v351
        %v353 = vadd.f32 %v261, %v352
        %vm354 = vcmask 253952
        %355 = vst.msk [vmem:[#allocation2] sm:$0x1] %vm354, %v353
        %s356 = sand.u32 %s131, 1
        %s357 = scalar_lea.sflag [#allocation5], %s356
        %s358 = sand.u32 %s131, 1
        %s359 = smul.addr %s358, 8
        %s360 = scalar_lea.vmem [#allocation8], %s359
        // Predicated region
        $region45: #{tpu_custom_call.1} parent=31 // pred_check
          %p361 = pneg %p141
        $region46: #{tpu_custom_call.1} parent=31 // pred_check_branch
          %363 = sbr.rel (%p361) target = $region48
        $region47: #{tpu_custom_call.1} parent=31 // pred_region
          %s365 = ssub.s32 128, 128
          %366 = vsyncadd %s357, %s365
          %s367 = sadd.s32 %s27, %s28
          %s368 = sadd.s32 %s367, %s26
          %s369 = smul.addr %s368, 128
          %s370 = scalar_lea.hbm %s3, %s369
          %s372 = sshll.u32 %s360, 4
          %s373 = int_to_ptr.vmem [resolvable:$true] %s372
          %375 = dma.vmem_to_hbm [thread:$0]  %s373, 128, %s370, %s357
        $region48: #{tpu_custom_call.1} parent=31 // pred_fallthru
          _
      $region32: #{tpu_custom_call.1} parent=5 // pred_fallthru
        _
      %p376 = scmp.le.s32.totalorder 2, %s16
      // Predicated region
      $region49: #{tpu_custom_call.1} parent=5 // pred_check
        %p377 = pneg %p376
      $region50: #{tpu_custom_call.1} parent=5 // pred_check_branch
        %379 = sbr.rel (%p377) target = $region52
      $region51: #{tpu_custom_call.1} parent=5 // pred_region
        %s380 = ssub.s32 %s16, 2
        // Predicated region
        $region53: #{tpu_custom_call.1} parent=51 // pred_check
          %p381 = pneg %p147
        $region54: #{tpu_custom_call.1} parent=51 // pred_check_branch
          %383 = sbr.rel (%p381) target = $region56
        $region55: #{tpu_custom_call.1} parent=51 // pred_region
          %s384 = sand.u32 %s132, 1
          %s385 = scalar_lea.sflag [#allocation5], %s384
          %s386 = sand.u32 %s132, 1
          %s387 = smul.addr %s386, 8
          %s388 = scalar_lea.vmem [#allocation8], %s387
          %389 = dma.done %s385, 128
        $region56: #{tpu_custom_call.1} parent=51 // pred_fallthru
          _
      $region52: #{tpu_custom_call.1} parent=5 // pred_fallthru
        _
    $region6: #{tpu_custom_call.1} parent=1 // loop_footer
      %s20 = sadd.s32 1, %s16
    $region7: #{tpu_custom_call.1} parent=1 // loop_footer_branch
      %15 = sbr.rel target = $region3
    $region8: #{tpu_custom_call.1} parent=1 // loop_exit
      _
    %390 = vsyncpa [#allocation4], 1
    %s391 = scalar_lea.sflag [#allocation4], 1
    %392 = vsyncpa %s391, 1
    %393 = vsyncpa [#allocation7], 1
    %s394 = scalar_lea.sflag [#allocation7], 1
    %395 = vsyncpa %s394, 1
    %396 = vsyncpa [#allocation5], 1
    %s397 = scalar_lea.sflag [#allocation5], 1
    %398 = vsyncpa %s397, 1

</llo_original>
